<compile_context>
chip_gen: v6e
topology: v6e:2x2x1
jax: 0.10.0
libtpu: 0.0.40
codegen_flags: <defaults>
</compile_context>

<pallas_src>
import jax
import jax.numpy as jnp
from jax import lax
from jax.experimental import pallas as pl
from jax.experimental.pallas import tpu as pltpu


def _gelu_exact(x):
    # nn.GELU() default: exact erf-based GELU (computed in f32 here).
    return 0.5 * x * (1.0 + lax.erf(x * (1.0 / jnp.sqrt(2.0).astype(x.dtype))))


def _sctuner_kernel(x_ref, wd_ref, bd_ref, wu_ref, bu_ref, o_ref):
    # x_ref : (dim, tile_hw)   input columns of the NCHW slab (orig dtype)
    # wd_ref: (rank, dim)      down weight, PyTorch layout (h = Wd @ x + bd)
    # bd_ref: (rank, 1)
    # wu_ref: (dim, rank)      up weight, PyTorch layout, pre-scaled by `scale`
    # bu_ref: (dim, 1)         up bias, pre-scaled by `scale`
    # o_ref : (dim, tile_hw)
    x = x_ref[...]
    compute_dtype = wd_ref.dtype

    # down: (rank, dim) @ (dim, tile_hw) -> (rank, tile_hw), f32 accumulate
    h = jnp.dot(wd_ref[...], x.astype(compute_dtype),
                preferred_element_type=jnp.float32)
    h = h + bd_ref[...].astype(jnp.float32)          # lane broadcast
    h = _gelu_exact(h)

    # up (scale folded in): (dim, rank) @ (rank, tile_hw) -> (dim, tile_hw)
    up = jnp.dot(wu_ref[...], h.astype(compute_dtype),
                 preferred_element_type=jnp.float32)
    up = up + bu_ref[...].astype(jnp.float32)        # lane broadcast

    # residual add in the original dtype / layout
    o_ref[...] = up.astype(o_ref.dtype) + x


def _choose_tile_hw(HW, dim, itemsize, act_vmem_budget):
    """Largest multiple of 128 that divides HW and fits the VMEM budget.

    Budget accounts for double-buffered in+out blocks (orig dtype) plus
    f32 temporaries of the up-projection.
    """
    bytes_per_col = dim * (4 * itemsize + 2 * 4)
    max_tile = max(128, ((act_vmem_budget // bytes_per_col) // 128) * 128)

    if HW % 128 != 0:
        # Small / unaligned spatial extent: one full-extent block per batch
        # (legal BlockSpec since it equals the full array dim).
        return HW

    tile_hw = min(HW, max_tile)
    tile_hw = max(128, (tile_hw // 128) * 128)
    while HW % tile_hw != 0:      # 128 always divides HW here -> terminates
        tile_hw -= 128
    return tile_hw


def sctuner_linear_forward(x_nchw, w_down, b_down, w_up, b_up, scale=1.0,
                           *, vmem_limit_bytes=40 * 1024 * 1024,
                           act_vmem_budget=24 * 1024 * 1024):
    """x_nchw: (B, C, H, W) with C == dim.  Weights in PyTorch layout:
       w_down: (rank, dim), b_down: (rank,), w_up: (dim, rank), b_up: (dim,)."""
    B, C, H, W = x_nchw.shape
    dim = C
    rank = w_down.shape[0]
    orig_dtype = x_nchw.dtype
    w_dtype = w_down.dtype
    HW = H * W

    # NCHW -> (B, dim, H*W): free row-major collapse, NO transpose.
    x3 = x_nchw.reshape(B, dim, HW)

    # Fold `scale` into the up projection (one-time O(dim*rank) cost).
    scale_w = jnp.asarray(scale, dtype=w_dtype)
    wu_s = w_up * scale_w
    bu_s = (b_up * jnp.asarray(scale, dtype=b_up.dtype)).reshape(dim, 1)
    bd_2d = b_down.reshape(rank, 1)

    itemsize = jnp.dtype(orig_dtype).itemsize
    tile_hw = _choose_tile_hw(HW, dim, itemsize, act_vmem_budget)
    n_hw = HW // tile_hw
    grid = (B, n_hw)

    w_itemsize = jnp.dtype(w_dtype).itemsize
    cost = pl.CostEstimate(
        flops=4 * B * HW * dim * rank,              # two matmuls
        transcendentals=B * HW * rank,              # erf
        bytes_accessed=(2 * B * HW * dim * itemsize
                        + (2 * dim * rank + dim + rank) * w_itemsize),
    )

    out3 = pl.pallas_call(
        _sctuner_kernel,
        out_shape=jax.ShapeDtypeStruct((B, dim, HW), orig_dtype),
        grid_spec=pltpu.PrefetchScalarGridSpec(
            num_scalar_prefetch=0,
            grid=grid,
            in_specs=[
                pl.BlockSpec((None, dim, tile_hw), lambda b, j: (b, 0, j)),
                pl.BlockSpec((rank, dim), lambda b, j: (0, 0)),
                pl.BlockSpec((rank, 1), lambda b, j: (0, 0)),
                pl.BlockSpec((dim, rank), lambda b, j: (0, 0)),
                pl.BlockSpec((dim, 1), lambda b, j: (0, 0)),
            ],
            out_specs=pl.BlockSpec((None, dim, tile_hw), lambda b, j: (b, 0, j)),
        ),
        compiler_params=pltpu.CompilerParams(
            dimension_semantics=("parallel", "parallel"),
            vmem_limit_bytes=vmem_limit_bytes),
        cost_estimate=cost,
    )(x3, w_down, bd_2d, wu_s, bu_s)

    # (B, dim, H*W) -> NCHW: free reshape, no transpose.
    return out3.reshape(B, C, H, W)


def _reference_forward(x_nchw, w_down, b_down, w_up, b_up, scale):
    # Pure-JAX mirror of the PyTorch forward (for correctness check).
    x_nhwc = jnp.transpose(x_nchw, (0, 2, 3, 1)).astype(w_down.dtype)
    down = x_nhwc @ w_down.T + b_down
    act = 0.5 * down * (1.0 + lax.erf(down / jnp.sqrt(2.0)))
    up = act @ w_up.T + b_up
    up = up.astype(x_nchw.dtype).transpose(0, 3, 1, 2)
    return scale * up + x_nchw


if __name__ == "__main__":
    # Small shapes consistent with the module: NCHW input with C == dim.
    B, dim, Hs, Ws = 2, 32, 8, 8
    rank = 8
    scale = 1.0

    key = jax.random.PRNGKey(0)
    kx, kwd, kbd, kbu = jax.random.split(key, 4)

    x = jax.random.normal(kx, (B, dim, Hs, Ws), dtype=jnp.float32)

    # Deterministic parameter init mirroring the module's __init__:
    #   down.weight ~ N(0, 1/rank), up.weight = 0,
    #   biases ~ Linear default U(-1/sqrt(fan_in), 1/sqrt(fan_in)).
    w_down = jax.random.normal(kwd, (rank, dim), dtype=jnp.float32) * (1.0 / rank)
    b_down = jax.random.uniform(kbd, (rank,), dtype=jnp.float32,
                                minval=-1.0 / jnp.sqrt(dim),
                                maxval=1.0 / jnp.sqrt(dim))
    w_up = jnp.zeros((dim, rank), dtype=jnp.float32)
    b_up = jax.random.uniform(kbu, (dim,), dtype=jnp.float32,
                              minval=-1.0 / jnp.sqrt(rank),
                              maxval=1.0 / jnp.sqrt(rank))

    out = sctuner_linear_forward(x, w_down, b_down, w_up, b_up, scale=scale)
    out = jax.block_until_ready(out)

    ref = _reference_forward(x, w_down, b_down, w_up, b_up, scale)
    assert out.shape == x.shape and out.dtype == x.dtype
    assert jnp.allclose(out, ref, atol=1e-5, rtol=1e-5), "mismatch vs reference"

    print("KERNEL_OK")
</pallas_src>

<mosaic_0001>
module attributes {stable_mosaic.version = 11 : i64} {
  func.func @_sctuner_kernel(%arg0: i32, %arg1: i32, %arg2: memref<1x32x64xf32, #tpu.memory_space<vmem>>, %arg3: memref<8x32xf32, #tpu.memory_space<vmem>>, %arg4: memref<8x1xf32, #tpu.memory_space<vmem>>, %arg5: memref<32x8xf32, #tpu.memory_space<vmem>>, %arg6: memref<32x1xf32, #tpu.memory_space<vmem>>, %arg7: memref<1x32x64xf32, #tpu.memory_space<vmem>>) attributes {dimension_semantics = [#tpu.dimension_semantics<parallel>, #tpu.dimension_semantics<parallel>], iteration_bounds = array<i64: 2, 1>, scalar_prefetch = 0 : i64, scratch_operands = 0 : i64, tpu.core_type = #tpu.core_type<tc>, window_params = [{transform_indices = @transform_0, window_bounds = array<i64: 1, 32, 64>}, {pipeline_mode = #tpu.pipeline_mode<synchronous>, transform_indices = @transform_1, window_bounds = array<i64: 8, 32>}, {pipeline_mode = #tpu.pipeline_mode<synchronous>, transform_indices = @transform_2, window_bounds = array<i64: 8, 1>}, {pipeline_mode = #tpu.pipeline_mode<synchronous>, transform_indices = @transform_3, window_bounds = array<i64: 32, 8>}, {pipeline_mode = #tpu.pipeline_mode<synchronous>, transform_indices = @transform_4, window_bounds = array<i64: 32, 1>}, {transform_indices = @transform_5, window_bounds = array<i64: 1, 32, 64>}]} {
    %c0 = arith.constant 0 : index
    %c0_0 = arith.constant 0 : index
    %c0_1 = arith.constant 0 : index
    %0 = vector.load %arg2[%c0, %c0_0, %c0_1] : memref<1x32x64xf32, #tpu.memory_space<vmem>>, vector<1x32x64xf32>
    %1 = vector.shape_cast %0 : vector<1x32x64xf32> to vector<32x64xf32>
    %c0_2 = arith.constant 0 : index
    %c0_3 = arith.constant 0 : index
    %2 = vector.load %arg3[%c0_2, %c0_3] : memref<8x32xf32, #tpu.memory_space<vmem>>, vector<8x32xf32>
    %cst = arith.constant dense<0.000000e+00> : vector<8x64xf32>
    %3 = tpu.matmul %2, %1, %cst {dimension_numbers = #tpu.dot_dimension_numbers<[1], [0], [0], [1], [0, 0, 1, 1], [], []>} : vector<8x32xf32>, vector<32x64xf32>, vector<8x64xf32> -> vector<8x64xf32>
    %c0_4 = arith.constant 0 : index
    %c0_5 = arith.constant 0 : index
    %4 = vector.load %arg4[%c0_4, %c0_5] : memref<8x1xf32, #tpu.memory_space<vmem>>, vector<8x1xf32>
    %5 = vector.broadcast %4 : vector<8x1xf32> to vector<8x64xf32>
    %6 = arith.addf %3, %5 : vector<8x64xf32>
    %cst_6 = arith.constant 5.000000e-01 : f32
    %7 = vector.broadcast %cst_6 : f32 to vector<8x64xf32>
    %8 = arith.mulf %7, %6 : vector<8x64xf32>
    %cst_7 = arith.constant 2.000000e+00 : f32
    %9 = math.sqrt %cst_7 : f32
    %cst_8 = arith.constant 1.000000e+00 : f32
    %10 = arith.divf %cst_8, %9 : f32
    %11 = vector.broadcast %10 : f32 to vector<8x64xf32>
    %12 = arith.mulf %6, %11 : vector<8x64xf32>
    %13 = math.erf %12 : vector<8x64xf32>
    %cst_9 = arith.constant 1.000000e+00 : f32
    %14 = vector.broadcast %cst_9 : f32 to vector<8x64xf32>
    %15 = arith.addf %14, %13 : vector<8x64xf32>
    %16 = arith.mulf %8, %15 : vector<8x64xf32>
    %c0_10 = arith.constant 0 : index
    %c0_11 = arith.constant 0 : index
    %17 = vector.load %arg5[%c0_10, %c0_11] : memref<32x8xf32, #tpu.memory_space<vmem>>, vector<32x8xf32>
    %cst_12 = arith.constant dense<0.000000e+00> : vector<32x64xf32>
    %18 = tpu.matmul %17, %16, %cst_12 {dimension_numbers = #tpu.dot_dimension_numbers<[1], [0], [0], [1], [0, 0, 1, 1], [], []>} : vector<32x8xf32>, vector<8x64xf32>, vector<32x64xf32> -> vector<32x64xf32>
    %c0_13 = arith.constant 0 : index
    %c0_14 = arith.constant 0 : index
    %19 = vector.load %arg6[%c0_13, %c0_14] : memref<32x1xf32, #tpu.memory_space<vmem>>, vector<32x1xf32>
    %20 = vector.broadcast %19 : vector<32x1xf32> to vector<32x64xf32>
    %21 = arith.addf %18, %20 : vector<32x64xf32>
    %22 = arith.addf %21, %1 : vector<32x64xf32>
    %c0_15 = arith.constant 0 : index
    %c0_16 = arith.constant 0 : index
    %c0_17 = arith.constant 0 : index
    %23 = vector.load %arg7[%c0_15, %c0_16, %c0_17] : memref<1x32x64xf32, #tpu.memory_space<vmem>>, vector<1x32x64xf32>
    %24 = vector.shape_cast %23 : vector<1x32x64xf32> to vector<32x64xf32>
    %25 = vector.shape_cast %22 : vector<32x64xf32> to vector<1x32x64xf32>
    tpu.vector_store %arg7[%c0_15, %c0_16, %c0_17], %25 {strides = array<i32>} : memref<1x32x64xf32, #tpu.memory_space<vmem>>, vector<1x32x64xf32>,
    return
  }
  func.func @transform_0(%arg0: i32, %arg1: i32) -> (i32, i32, i32) {
    %c0_i32 = arith.constant 0 : i32
    %c0_i32_0 = arith.constant 0 : i32
    return %arg0, %c0_i32, %arg1 : i32, i32, i32
  }
  func.func @transform_1(%arg0: i32, %arg1: i32) -> (i32, i32) {
    %c0_i32 = arith.constant 0 : i32
    %c0_i32_0 = arith.constant 0 : i32
    %c0_i32_1 = arith.constant 0 : i32
    return %c0_i32, %c0_i32_0 : i32, i32
  }
  func.func @transform_2(%arg0: i32, %arg1: i32) -> (i32, i32) {
    %c0_i32 = arith.constant 0 : i32
    %c0_i32_0 = arith.constant 0 : i32
    %c0_i32_1 = arith.constant 0 : i32
    return %c0_i32, %c0_i32_0 : i32, i32
  }
  func.func @transform_3(%arg0: i32, %arg1: i32) -> (i32, i32) {
    %c0_i32 = arith.constant 0 : i32
    %c0_i32_0 = arith.constant 0 : i32
    %c0_i32_1 = arith.constant 0 : i32
    return %c0_i32, %c0_i32_0 : i32, i32
  }
  func.func @transform_4(%arg0: i32, %arg1: i32) -> (i32, i32) {
    %c0_i32 = arith.constant 0 : i32
    %c0_i32_0 = arith.constant 0 : i32
    %c0_i32_1 = arith.constant 0 : i32
    return %c0_i32, %c0_i32_0 : i32, i32
  }
  func.func @transform_5(%arg0: i32, %arg1: i32) -> (i32, i32, i32) {
    %c0_i32 = arith.constant 0 : i32
    %c0_i32_0 = arith.constant 0 : i32
    return %arg0, %c0_i32, %arg1 : i32, i32, i32
  }
}

</mosaic_0001>

<llo_original>
// kernel: tpu_custom_call.1
$region0: #{tpu_custom_call.1}
  #allocation0 [shape = 'u32[]', space=smem, size = 0x4, offset = 0x4, fixed_abs, tag = 'smem constant byte address 0x4 - core index']
  #allocation1 [shape = 'u32[144,128]{1,0:T(1,128)}', space=vmem, size = 0x12000, scoped, tag = 'internal scratch']
  %s0 = inlined_call_operand.vmem [shape: f32[2,32,64], index: 0, kind: input, shape index: {}]
  %s1 = inlined_call_operand.vmem [shape: f32[8,32], index: 1, kind: input, shape index: {}]
  %s2 = inlined_call_operand.vmem [shape: f32[8,1], index: 2, kind: input, shape index: {}]
  %s3 = inlined_call_operand.vmem [shape: f32[32,8], index: 3, kind: input, shape index: {}]
  %s4 = inlined_call_operand.vmem [shape: f32[32,1], index: 4, kind: input, shape index: {}]
  %s5 = inlined_call_operand.hbm [shape: f32[2,32,64], index: 5, kind: output, shape index: {}]
  %s6 = sld [smem:[#allocation0]]
  $region53: #{tpu_custom_call.1} parent=0
    _
  %s8 = ssub.s32 1, %s6
  %s9 = scalar_select 0, %s8, %s6
  $region1: #{tpu_custom_call.1} parent=0
    #allocation2 [shape = 'u8[32768]{0}', space=vmem, size = 0x8000, scoped, tag = 'output window, operand 0']
    #allocation3 [shape = 's32[2]{0}', space=sflag, size = 0x8, scoped, tag = 'scoped memory for tpu_custom_call.1']
    %10 = vsyncpa [#allocation3], 0
    %s11 = scalar_lea.sflag [#allocation3], 1
    %12 = vsyncpa %s11, 0
    loop: start=0, step=1, limit=4
    $region2: #{tpu_custom_call.1} parent=1 // loop_pre_header
      _
    $region3: #{tpu_custom_call.1} parent=1 // loop_header
      %s14 = sphi 0, %s18
      %p15 = scmp.ge.s32.totalorder %s14, 4
      %s21 = sphi 0, %s33
      %s22 = sphi 0, %s29
      %s23 = sphi 0, %s21
      %s24 = sphi 0, %s22
      %s25 = sphi 0, %s23
      %s26 = sphi 0, %s24
      %s38 = sphi 0, %s40
      %s41 = sphi 0, %s38
      %s42 = sphi 0, %s41
      %s58 = sphi 0, %s42
      %s62 = sphi 0, %s62
      %s64 = sphi 0, %s62
      %s65 = sphi 0, %s64
      %s79 = sphi 0, %s65
      %s83 = sphi 0, %s83
      %s85 = sphi 0, %s83
      %s86 = sphi 0, %s85
      %s100 = sphi 0, %s86
      %s104 = sphi 0, %s104
      %s106 = sphi 0, %s104
      %s107 = sphi 0, %s106
      %s121 = sphi 0, %s107
      %s125 = sphi 0, %s125
      %s127 = sphi 0, %s125
      %s128 = sphi 0, %s127
      %s142 = sphi 0, %s128
      %s150 = sphi 0, %s152
      %s153 = sphi 0, %s150
      %s154 = sphi 0, %s153
      %s170 = sphi 0, %s154
    $region4: #{tpu_custom_call.1} parent=1 // loop_header_branch
      %17 = sbr.rel (%p15) target = $region8
    $region5: #{tpu_custom_call.1} parent=1 // loop_body
      %s19 = ssub.s32 %s14, 1
      %s20 = ssub.s32 %s14, 2
      %s27 = sadd.s32 1, %s22
      %p28 = scmp.ge.s32.totalorder %s27, 1
      %s29 = scalar_select %p28, 0, %s27
      %s30 = sadd.s32 1, %s21
      %s31 = scalar_select %p28, %s30, %s21
      %p32 = scmp.ge.s32.totalorder %s31, 2
      %s33 = scalar_select %p32, 0, %s31
      %s34 = ssub.s32 %s21, %s33
      %s35 = ssub.s32 %s22, %s29
      %s36 = sor.u32 %s34, %s35
      %p37 = scmp.eq.s32.totalorder %s36, 0
      %s39 = sadd.s32 %s38, 1
      %s40 = scalar_select %p37, %s38, %s39
      %p43 = pneg %p37
      %p44 = scmp.eq.s32.totalorder %s14, 1
      %p45 = por %p43, %p44
      %p46 = scmp.ne.s32.totalorder %s38, %s41
      %p47 = scmp.eq.s32.totalorder %s14, 0
      %p48 = por %p46, %p47
      %p49 = scmp.ne.s32.totalorder %s38, %s41
      %p50 = scmp.eq.s32.totalorder %s19, 1
      %p51 = por %p49, %p50
      %p52 = scmp.ne.s32.totalorder %s41, %s42
      %p53 = scmp.eq.s32.totalorder %s19, 0
      %p54 = por %p52, %p53
      %p55 = scmp.ne.s32.totalorder %s41, %s42
      %p56 = scmp.eq.s32.totalorder %s20, 1
      %p57 = por %p55, %p56
      %p59 = scmp.ne.s32.totalorder %s42, %s58
      %p60 = scmp.eq.s32.totalorder %s20, 0
      %p61 = por %p59, %p60
      %s63 = sadd.s32 %s62, 1
      %p66 = scmp.eq.s32.totalorder %s14, 1
      %p67 = scmp.ne.s32.totalorder %s62, %s64
      %p68 = scmp.eq.s32.totalorder %s14, 0
      %p69 = por %p67, %p68
      %p70 = scmp.ne.s32.totalorder %s62, %s64
      %p71 = scmp.eq.s32.totalorder %s19, 1
      %p72 = por %p70, %p71
      %p73 = scmp.ne.s32.totalorder %s64, %s65
      %p74 = scmp.eq.s32.totalorder %s19, 0
      %p75 = por %p73, %p74
      %p76 = scmp.ne.s32.totalorder %s64, %s65
      %p77 = scmp.eq.s32.totalorder %s20, 1
      %p78 = por %p76, %p77
      %p80 = scmp.ne.s32.totalorder %s65, %s79
      %p81 = scmp.eq.s32.totalorder %s20, 0
      %p82 = por %p80, %p81
      %s84 = sadd.s32 %s83, 1
      %p87 = scmp.eq.s32.totalorder %s14, 1
      %p88 = scmp.ne.s32.totalorder %s83, %s85
      %p89 = scmp.eq.s32.totalorder %s14, 0
      %p90 = por %p88, %p89
      %p91 = scmp.ne.s32.totalorder %s83, %s85
      %p92 = scmp.eq.s32.totalorder %s19, 1
      %p93 = por %p91, %p92
      %p94 = scmp.ne.s32.totalorder %s85, %s86
      %p95 = scmp.eq.s32.totalorder %s19, 0
      %p96 = por %p94, %p95
      %p97 = scmp.ne.s32.totalorder %s85, %s86
      %p98 = scmp.eq.s32.totalorder %s20, 1
      %p99 = por %p97, %p98
      %p101 = scmp.ne.s32.totalorder %s86, %s100
      %p102 = scmp.eq.s32.totalorder %s20, 0
      %p103 = por %p101, %p102
      %s105 = sadd.s32 %s104, 1
      %p108 = scmp.eq.s32.totalorder %s14, 1
      %p109 = scmp.ne.s32.totalorder %s104, %s106
      %p110 = scmp.eq.s32.totalorder %s14, 0
      %p111 = por %p109, %p110
      %p112 = scmp.ne.s32.totalorder %s104, %s106
      %p113 = scmp.eq.s32.totalorder %s19, 1
      %p114 = por %p112, %p113
      %p115 = scmp.ne.s32.totalorder %s106, %s107
      %p116 = scmp.eq.s32.totalorder %s19, 0
      %p117 = por %p115, %p116
      %p118 = scmp.ne.s32.totalorder %s106, %s107
      %p119 = scmp.eq.s32.totalorder %s20, 1
      %p120 = por %p118, %p119
      %p122 = scmp.ne.s32.totalorder %s107, %s121
      %p123 = scmp.eq.s32.totalorder %s20, 0
      %p124 = por %p122, %p123
      %s126 = sadd.s32 %s125, 1
      %p129 = scmp.eq.s32.totalorder %s14, 1
      %p130 = scmp.ne.s32.totalorder %s125, %s127
      %p131 = scmp.eq.s32.totalorder %s14, 0
      %p132 = por %p130, %p131
      %p133 = scmp.ne.s32.totalorder %s125, %s127
      %p134 = scmp.eq.s32.totalorder %s19, 1
      %p135 = por %p133, %p134
      %p136 = scmp.ne.s32.totalorder %s127, %s128
      %p137 = scmp.eq.s32.totalorder %s19, 0
      %p138 = por %p136, %p137
      %p139 = scmp.ne.s32.totalorder %s127, %s128
      %p140 = scmp.eq.s32.totalorder %s20, 1
      %p141 = por %p139, %p140
      %p143 = scmp.ne.s32.totalorder %s128, %s142
      %p144 = scmp.eq.s32.totalorder %s20, 0
      %p145 = por %p143, %p144
      %s146 = ssub.s32 %s21, %s33
      %s147 = ssub.s32 %s22, %s29
      %s148 = sor.u32 %s146, %s147
      %p149 = scmp.eq.s32.totalorder %s148, 0
      %s151 = sadd.s32 %s150, 1
      %s152 = scalar_select %p149, %s150, %s151
      %p155 = pneg %p149
      %p156 = scmp.eq.s32.totalorder %s14, 1
      %p157 = por %p155, %p156
      %p158 = scmp.ne.s32.totalorder %s150, %s153
      %p159 = scmp.eq.s32.totalorder %s14, 0
      %p160 = por %p158, %p159
      %p161 = scmp.ne.s32.totalorder %s150, %s153
      %p162 = scmp.eq.s32.totalorder %s19, 1
      %p163 = por %p161, %p162
      %p164 = scmp.ne.s32.totalorder %s153, %s154
      %p165 = scmp.eq.s32.totalorder %s19, 0
      %p166 = por %p164, %p165
      %p167 = scmp.ne.s32.totalorder %s153, %s154
      %p168 = scmp.eq.s32.totalorder %s20, 1
      %p169 = por %p167, %p168
      %p171 = scmp.ne.s32.totalorder %s154, %s170
      %p172 = scmp.eq.s32.totalorder %s20, 0
      %p173 = por %p171, %p172
      %p174 = scmp.le.s32.totalorder 1, %s14
      %p175 = scmp.lt.s32.totalorder %s14, 3
      %p176 = pnand %p174, %p175
      %p177 = pneg %p176
      // Predicated region
      $region9: #{tpu_custom_call.1} parent=5 // pred_check
        _
      $region10: #{tpu_custom_call.1} parent=5 // pred_check_branch
        %179 = sbr.rel (%p176) target = $region12
      $region11: #{tpu_custom_call.1} parent=5 // pred_region
        %s180 = ssub.s32 %s14, 1
        // Predicated region
        $region13: #{tpu_custom_call.1} parent=11 // pred_check
          %p181 = pneg %p75
        $region14: #{tpu_custom_call.1} parent=11 // pred_check_branch
          %183 = sbr.rel (%p181) target = $region16
        $region15: #{tpu_custom_call.1} parent=11 // pred_region
          _
        $region16: #{tpu_custom_call.1} parent=11 // pred_fallthru
          _
        // Predicated region
        $region17: #{tpu_custom_call.1} parent=11 // pred_check
          %p184 = pneg %p96
        $region18: #{tpu_custom_call.1} parent=11 // pred_check_branch
          %186 = sbr.rel (%p184) target = $region20
        $region19: #{tpu_custom_call.1} parent=11 // pred_region
          _
        $region20: #{tpu_custom_call.1} parent=11 // pred_fallthru
          _
        // Predicated region
        $region21: #{tpu_custom_call.1} parent=11 // pred_check
          %p187 = pneg %p117
        $region22: #{tpu_custom_call.1} parent=11 // pred_check_branch
          %189 = sbr.rel (%p187) target = $region24
        $region23: #{tpu_custom_call.1} parent=11 // pred_region
          _
        $region24: #{tpu_custom_call.1} parent=11 // pred_fallthru
          _
        // Predicated region
        $region25: #{tpu_custom_call.1} parent=11 // pred_check
          %p190 = pneg %p138
        $region26: #{tpu_custom_call.1} parent=11 // pred_check_branch
          %192 = sbr.rel (%p190) target = $region28
        $region27: #{tpu_custom_call.1} parent=11 // pred_region
          _
        $region28: #{tpu_custom_call.1} parent=11 // pred_fallthru
          _
      $region12: #{tpu_custom_call.1} parent=5 // pred_fallthru
        _
      %p193 = scmp.lt.s32.totalorder %s14, 2
      // Predicated region
      $region29: #{tpu_custom_call.1} parent=5 // pred_check
        %p194 = pneg %p193
      $region30: #{tpu_custom_call.1} parent=5 // pred_check_branch
        %196 = sbr.rel (%p194) target = $region32
      $region31: #{tpu_custom_call.1} parent=5 // pred_region
        // Predicated region
        $region33: #{tpu_custom_call.1} parent=31 // pred_check
          %p197 = pneg %p48
        $region34: #{tpu_custom_call.1} parent=31 // pred_check_branch
          %199 = sbr.rel (%p197) target = $region36
        $region35: #{tpu_custom_call.1} parent=31 // pred_region
          %p200 = scmp.lt.s32.totalorder %s21, 1
          %s201 = scalar_select %p200, %s21, 1
          %p202 = scmp.lt.s32.totalorder %s22, 0
          %s203 = scalar_select %p202, %s22, 0
          %s204 = smul.addr %s201, 4
          %s205 = sadd.s32 %s203, %s204
          %s206 = smul.addr %s205, 8
          %s207 = scalar_lea.vmem %s0, %s206
        $region36: #{tpu_custom_call.1} parent=31 // pred_fallthru
          _
      $region32: #{tpu_custom_call.1} parent=5 // pred_fallthru
        _
      %p208 = scmp.le.s32.totalorder 1, %s14
      %p209 = scmp.lt.s32.totalorder %s14, 3
      %p210 = pnand %p208, %p209
      %p211 = pneg %p210
      // Predicated region
      $region37: #{tpu_custom_call.1} parent=5 // pred_check
        _
      $region38: #{tpu_custom_call.1} parent=5 // pred_check_branch
        %213 = sbr.rel (%p210) target = $region40
      $region39: #{tpu_custom_call.1} parent=5 // pred_region
        %s214 = ssub.s32 %s14, 1
        %p215 = scmp.lt.s32.totalorder %s23, 1
        %s216 = scalar_select %p215, %s23, 1
        %p217 = scmp.lt.s32.totalorder %s24, 0
        %s218 = scalar_select %p217, %s24, 0
        %s219 = smul.addr %s216, 4
        %s220 = sadd.s32 %s218, %s219
        %s221 = smul.addr %s220, 8
        %s222 = scalar_lea.vmem %s0, %s221
        %p223 = pneg %p54
        %p224 = pneg %p51
        %p225 = pneg %p75
        %p226 = pneg %p72
        %p227 = pneg %p96
        %p228 = pneg %p93
        %p229 = pneg %p117
        %p230 = pneg %p114
        %p231 = pneg %p138
        %p232 = pneg %p135
        %p233 = pneg %p166
        %p234 = pneg %p163
        %s235 = sand.u32 %s153, 1
        %s236 = scalar_lea.sflag [#allocation3], %s235
        %s237 = sand.u32 %s153, 1
        %s238 = smul.addr %s237, 32
        %s239 = scalar_lea.vmem [#allocation2], %s238
        %p240 = scmp.lt.s32.totalorder %s23, 1
        %s241 = scalar_select %p240, %s23, 1
        %p242 = scmp.lt.s32.totalorder %s24, 0
        %s243 = scalar_select %p242, %s24, 0
        %s244 = smul.addr %s241, 4
        %s245 = sadd.s32 %s243, %s244
        %s246 = smul.addr %s245, 8
        %s247 = scalar_lea.vmem %s0, %s246
        %v248 = vld [vmem:[%s247] sm:$0xff]
        %v249 = vld [vmem:[%s247 + $0x8] sm:$0xff]
        %v250 = vld [vmem:[%s247 + $0x10] sm:$0xff]
        %v251 = vld [vmem:[%s247 + $0x18] sm:$0xff]
        %v252 = vld [vmem:[%s1] sm:$0xff]
        %v253 = vld [vmem:[%s2] sm:$0xff]
        %255 = vset.pattern.permute.xlu0 0
        %256 = vperm.xlu0 %255, %v253
        %v257 = vpop.permute.xlu0 %256
        %vm259 = vcmask 261120
        %v261 = vsel %vm259, %v252, 0
        %263 = vmatprep.subr.mxu0 0.0
        %264 = vmatpush1.msra.mxu0 0.0
        %265 = vmatprep.subr.mxu0 0.0
        %266 = vmatpush1.msra.mxu0 0.0
        %267 = vmatprep.subr.mxu0 0.0
        %268 = vmatpush1.msra.mxu0 0.0
        %269 = vmatprep.subr.mxu0 0.0
        %270 = vmatpush1.msra.mxu0 0.0
        %271 = vmatprep.subr.mxu0 0.0
        %272 = vmatpush1.msra.mxu0 0.0
        %273 = vmatprep.subr.mxu0 0.0
        %274 = vmatpush1.msra.mxu0 0.0
        %275 = vmatprep.subr.mxu0 0.0
        %276 = vmatpush1.msra.mxu0 0.0
        %277 = vmatprep.subr.mxu0 0.0
        %278 = vmatpush1.msra.mxu0 0.0
        %279 = vmatprep.subr.mxu0 0.0
        %280 = vmatpush1.msra.mxu0 0.0
        %281 = vmatprep.subr.mxu0 0.0
        %282 = vmatpush1.msra.mxu0 0.0
        %283 = vmatprep.subr.mxu0 0.0
        %284 = vmatpush1.msra.mxu0 0.0
        %285 = vmatprep.subr.mxu0 0.0
        %286 = vmatpush1.msra.mxu0 0.0
        %287 = vmatprep.subr.mxu0 0.0
        %288 = vmatpush1.msra.mxu0 %v251
        %289 = vmatprep.subr.mxu0 0.0
        %290 = vmatpush1.msra.mxu0 %v250
        %291 = vmatprep.subr.mxu0 0.0
        %292 = vmatpush1.msra.mxu0 %v249
        %293 = vmatprep.subr.mxu0 0.0
        %294 = vmatpush1.msra.mxu0 %v248
        %295 = vmatprep.subr.mxu0 0.0
        %296 = vmatpush2.msra.mxu0 0.0
        %297 = vmatprep.subr.mxu0 0.0
        %298 = vmatpush2.msra.mxu0 0.0
        %299 = vmatprep.subr.mxu0 0.0
        %300 = vmatpush2.msra.mxu0 0.0
        %301 = vmatprep.subr.mxu0 0.0
        %302 = vmatpush2.msra.mxu0 0.0
        %303 = vmatprep.subr.mxu0 0.0
        %304 = vmatpush2.msra.mxu0 0.0
        %305 = vmatprep.subr.mxu0 0.0
        %306 = vmatpush2.msra.mxu0 0.0
        %307 = vmatprep.subr.mxu0 0.0
        %308 = vmatpush2.msra.mxu0 0.0
        %309 = vmatprep.subr.mxu0 0.0
        %310 = vmatpush2.msra.mxu0 0.0
        %311 = vmatprep.subr.mxu0 0.0
        %312 = vmatpush2.msra.mxu0 0.0
        %313 = vmatprep.subr.mxu0 0.0
        %314 = vmatpush2.msra.mxu0 0.0
        %315 = vmatprep.subr.mxu0 0.0
        %316 = vmatpush2.msra.mxu0 0.0
        %317 = vmatprep.subr.mxu0 0.0
        %318 = vmatpush2.msra.mxu0 0.0
        %319 = vmatprep.subr.mxu0 0.0
        %320 = vmatpush2.msra.mxu0 0.0
        %321 = vmatprep.subr.mxu0 0.0
        %322 = vmatpush2.msra.mxu0 0.0
        %323 = vmatprep.subr.mxu0 0.0
        %324 = vmatpush2.msra.mxu0 0.0
        %325 = vmatprep.subr.mxu0 0.0
        %326 = vmatpush2.msra.mxu0 0.0
        %327 = vmatprep.mubr.f32.mxu0 0.0
        %328 = vmatmul.mubr.f32.gmra.mxu0 %v261
        %v329 = vpop.f32.mrf.mxu0
        %v330 = vadd.f32 %v257, %v329
        %v331 = vpop.f32.mrf.mxu0
        %332 = vdwg.mxu0
        %v333 = vmul.f32 %v330, 0.5
        %v334 = vmul.f32 %v330, 0.70710677
        %v335 = verf.f32.pop %v334
        %v336 = vadd.f32 %v335, 1.0
        %v337 = vmul.f32 %v333, %v336
        %v338 = vld [vmem:[%s3] sm:$0xff]
        %v339 = vld [vmem:[%s3 + $0x8] sm:$0xff]
        %v340 = vld [vmem:[%s3 + $0x10] sm:$0xff]
        %v341 = vld [vmem:[%s3 + $0x18] sm:$0xff]
        %v342 = vld [vmem:[%s4] sm:$0xff]
        %v343 = vld [vmem:[%s4 + $0x8] sm:$0xff]
        %v344 = vld [vmem:[%s4 + $0x10] sm:$0xff]
        %v345 = vld [vmem:[%s4 + $0x18] sm:$0xff]
        %347 = vset.pattern.permute.xlu0 0
        %348 = vperm.xlu0 %347, %v342
        %v349 = vpop.permute.xlu0 %348
        %352 = vset.pattern.permute.xlu0 0
        %353 = vperm.xlu0 %352, %v343
        %v354 = vpop.permute.xlu0 %353
        %357 = vset.pattern.permute.xlu0 0
        %358 = vperm.xlu0 %357, %v344
        %v359 = vpop.permute.xlu0 %358
        %362 = vset.pattern.permute.xlu0 0
        %363 = vperm.xlu0 %362, %v345
        %v364 = vpop.permute.xlu0 %363
        %vm366 = vcmask 64512
        %v368 = vsel %vm366, %v338, 0
        %v371 = vsel %vm366, %v339, 0
        %v374 = vsel %vm366, %v340, 0
        %v377 = vsel %vm366, %v341, 0
        %379 = vmatprep.subr.mxu0 0.0
        %380 = vmatpush1.msra.mxu0 0.0
        %381 = vmatprep.subr.mxu0 0.0
        %382 = vmatpush1.msra.mxu0 0.0
        %383 = vmatprep.subr.mxu0 0.0
        %384 = vmatpush1.msra.mxu0 0.0
        %385 = vmatprep.subr.mxu0 0.0
        %386 = vmatpush1.msra.mxu0 0.0
        %387 = vmatprep.subr.mxu0 0.0
        %388 = vmatpush1.msra.mxu0 0.0
        %389 = vmatprep.subr.mxu0 0.0
        %390 = vmatpush1.msra.mxu0 0.0
        %391 = vmatprep.subr.mxu0 0.0
        %392 = vmatpush1.msra.mxu0 0.0
        %393 = vmatprep.subr.mxu0 0.0
        %394 = vmatpush1.msra.mxu0 0.0
        %395 = vmatprep.subr.mxu0 0.0
        %396 = vmatpush1.msra.mxu0 0.0
        %397 = vmatprep.subr.mxu0 0.0
        %398 = vmatpush1.msra.mxu0 0.0
        %399 = vmatprep.subr.mxu0 0.0
        %400 = vmatpush1.msra.mxu0 0.0
        %401 = vmatprep.subr.mxu0 0.0
        %402 = vmatpush1.msra.mxu0 0.0
        %403 = vmatprep.subr.mxu0 0.0
        %404 = vmatpush1.msra.mxu0 0.0
        %405 = vmatprep.subr.mxu0 0.0
        %406 = vmatpush1.msra.mxu0 0.0
        %407 = vmatprep.subr.mxu0 0.0
        %408 = vmatpush1.msra.mxu0 0.0
        %409 = vmatprep.subr.mxu0 0.0
        %410 = vmatpush1.msra.mxu0 %v337
        %411 = vmatprep.subr.mxu0 0.0
        %412 = vmatpush2.msra.mxu0 0.0
        %413 = vmatprep.subr.mxu0 0.0
        %414 = vmatpush2.msra.mxu0 0.0
        %415 = vmatprep.subr.mxu0 0.0
        %416 = vmatpush2.msra.mxu0 0.0
        %417 = vmatprep.subr.mxu0 0.0
        %418 = vmatpush2.msra.mxu0 0.0
        %419 = vmatprep.subr.mxu0 0.0
        %420 = vmatpush2.msra.mxu0 0.0
        %421 = vmatprep.subr.mxu0 0.0
        %422 = vmatpush2.msra.mxu0 0.0
        %423 = vmatprep.subr.mxu0 0.0
        %424 = vmatpush2.msra.mxu0 0.0
        %425 = vmatprep.subr.mxu0 0.0
        %426 = vmatpush2.msra.mxu0 0.0
        %427 = vmatprep.subr.mxu0 0.0
        %428 = vmatpush2.msra.mxu0 0.0
        %429 = vmatprep.subr.mxu0 0.0
        %430 = vmatpush2.msra.mxu0 0.0
        %431 = vmatprep.subr.mxu0 0.0
        %432 = vmatpush2.msra.mxu0 0.0
        %433 = vmatprep.subr.mxu0 0.0
        %434 = vmatpush2.msra.mxu0 0.0
        %435 = vmatprep.subr.mxu0 0.0
        %436 = vmatpush2.msra.mxu0 0.0
        %437 = vmatprep.subr.mxu0 0.0
        %438 = vmatpush2.msra.mxu0 0.0
        %439 = vmatprep.subr.mxu0 0.0
        %440 = vmatpush2.msra.mxu0 0.0
        %441 = vmatprep.subr.mxu0 0.0
        %442 = vmatpush2.msra.mxu0 0.0
        %443 = vmatprep.mubr.f32.mxu0 0.0
        %444 = vmatmul.mubr.f32.gmra.mxu0 %v368
        %v445 = vpop.f32.mrf.mxu0
        %v446 = vadd.f32 %v349, %v445
        %v447 = vpop.f32.mrf.mxu0
        %448 = vmatprep.mubr.f32.mxu0 0.0
        %449 = vmatmul.mubr.f32.gmra.mxu0 %v371
        %v450 = vpop.f32.mrf.mxu0
        %v451 = vadd.f32 %v354, %v450
        %v452 = vpop.f32.mrf.mxu0
        %453 = vmatprep.mubr.f32.mxu0 0.0
        %454 = vmatmul.mubr.f32.gmra.mxu0 %v374
        %v455 = vpop.f32.mrf.mxu0
        %v456 = vadd.f32 %v359, %v455
        %v457 = vpop.f32.mrf.mxu0
        %458 = vmatprep.mubr.f32.mxu0 0.0
        %459 = vmatmul.mubr.f32.gmra.mxu0 %v377
        %v460 = vpop.f32.mrf.mxu0
        %v461 = vadd.f32 %v364, %v460
        %v462 = vpop.f32.mrf.mxu0
        %463 = vdwg.mxu0
        %v464 = vadd.f32 %v446, %v248
        %v465 = vadd.f32 %v451, %v249
        %v466 = vadd.f32 %v456, %v250
        %v467 = vadd.f32 %v461, %v251
        %vm468 = vcmask 523264
        %469 = vst.msk [vmem:[%s239] sm:$0xff] %vm468, %v464
        %470 = vst.msk [vmem:[%s239 + $0x8] sm:$0xff] %vm468, %v465
        %471 = vst.msk [vmem:[%s239 + $0x10] sm:$0xff] %vm468, %v466
        %472 = vst.msk [vmem:[%s239 + $0x18] sm:$0xff] %vm468, %v467
        %s473 = sand.u32 %s153, 1
        %s474 = scalar_lea.sflag [#allocation3], %s473
        %s475 = sand.u32 %s153, 1
        %s476 = smul.addr %s475, 32
        %s477 = scalar_lea.vmem [#allocation2], %s476
        // Predicated region
        $region41: #{tpu_custom_call.1} parent=39 // pred_check
          %p478 = pneg %p163
        $region42: #{tpu_custom_call.1} parent=39 // pred_check_branch
          %480 = sbr.rel (%p478) target = $region44
        $region43: #{tpu_custom_call.1} parent=39 // pred_region
          %s482 = ssub.s32 512, 512
          %483 = vsyncadd %s474, %s482
          %s484 = smul.addr %s23, 4
          %s485 = sadd.s32 %s24, %s484
          %s486 = smul.addr %s485, 128
          %s487 = scalar_lea.hbm %s5, %s486
          %s488 = sshll.u32 %s477, 4
          %s489 = int_to_ptr.vmem [resolvable:$true] %s488
          %494 = dma.vmem_to_hbm [thread:$0]  %s489, 512, %s487, %s474, 128, 128, 8
        $region44: #{tpu_custom_call.1} parent=39 // pred_fallthru
          _
      $region40: #{tpu_custom_call.1} parent=5 // pred_fallthru
        _
      %p495 = scmp.le.s32.totalorder 2, %s14
      // Predicated region
      $region45: #{tpu_custom_call.1} parent=5 // pred_check
        %p496 = pneg %p495
      $region46: #{tpu_custom_call.1} parent=5 // pred_check_branch
        %498 = sbr.rel (%p496) target = $region48
      $region47: #{tpu_custom_call.1} parent=5 // pred_region
        %s499 = ssub.s32 %s14, 2
        // Predicated region
        $region49: #{tpu_custom_call.1} parent=47 // pred_check
          %p500 = pneg %p169
        $region50: #{tpu_custom_call.1} parent=47 // pred_check_branch
          %502 = sbr.rel (%p500) target = $region52
        $region51: #{tpu_custom_call.1} parent=47 // pred_region
          %s503 = sand.u32 %s154, 1
          %s504 = scalar_lea.sflag [#allocation3], %s503
          %s505 = sand.u32 %s154, 1
          %s506 = smul.addr %s505, 32
          %s507 = scalar_lea.vmem [#allocation2], %s506
          %508 = dma.done %s504, 512
        $region52: #{tpu_custom_call.1} parent=47 // pred_fallthru
          _
      $region48: #{tpu_custom_call.1} parent=5 // pred_fallthru
        _
    $region6: #{tpu_custom_call.1} parent=1 // loop_footer
      %s18 = sadd.s32 1, %s14
    $region7: #{tpu_custom_call.1} parent=1 // loop_footer_branch
      %13 = sbr.rel target = $region3
    $region8: #{tpu_custom_call.1} parent=1 // loop_exit
      _
    %509 = vsyncpa [#allocation3], 1
    %s510 = scalar_lea.sflag [#allocation3], 1
    %511 = vsyncpa %s510, 1

</llo_original>
